<compile_context>
chip_gen: v7x
topology: tpu7x:2x2x1
jax: 0.10.0
libtpu: 0.0.40
codegen_flags: <defaults>
</compile_context>

<pallas_src>
import jax
import jax.numpy as jnp
from jax.experimental import pallas as pl
from jax.experimental.pallas import tpu as pltpu


# --------------------------------------------------------------------------
# Kernels
# --------------------------------------------------------------------------
def _conv_stats_kernel(x_ref, w_ref, b_ref, sum_ref, sq_ref):
    """1x1 conv kept in VMEM; accumulate per-(n, s_outer) sum / sum-of-squares."""
    @pl.when(pl.program_id(2) == 0)
    def _():
        sum_ref[...] = jnp.zeros_like(sum_ref)
        sq_ref[...] = jnp.zeros_like(sq_ref)

    y = jnp.dot(w_ref[...], x_ref[0],
                preferred_element_type=jnp.float32) + b_ref[...]   # (classes, TS)
    sum_ref[0, 0] += jnp.sum(y, axis=1, keepdims=True)
    sq_ref[0, 0] += jnp.sum(y * y, axis=1, keepdims=True)


def _conv_stats_write_kernel(x_ref, w_ref, b_ref, y_ref, sum_ref, sq_ref):
    """Same as above, but also writes y to HBM (used when classes << Cin)."""
    @pl.when(pl.program_id(2) == 0)
    def _():
        sum_ref[...] = jnp.zeros_like(sum_ref)
        sq_ref[...] = jnp.zeros_like(sq_ref)

    y = jnp.dot(w_ref[...], x_ref[0],
                preferred_element_type=jnp.float32) + b_ref[...]   # (classes, TS)
    y_ref[0] = y
    sum_ref[0, 0] += jnp.sum(y, axis=1, keepdims=True)
    sq_ref[0, 0] += jnp.sum(y * y, axis=1, keepdims=True)


def _conv_bn_prelu_kernel(x_ref, w_ref, b_ref, a_ref, o_ref):
    """Folded conv+BN affine (recompute from x) followed by per-channel PReLU."""
    z = jnp.dot(w_ref[...], x_ref[0],
                preferred_element_type=jnp.float32) + b_ref[...]   # (classes, TS)
    o_ref[0] = jnp.where(z > 0, z, a_ref[...] * z).astype(o_ref.dtype)


def _bn_prelu_kernel(y_ref, scale_ref, shift_ref, a_ref, o_ref):
    """BN affine + PReLU over the stored conv output y."""
    z = y_ref[0] * scale_ref[...] + shift_ref[...]                  # (classes, TS)
    o_ref[0] = jnp.where(z > 0, z, a_ref[...] * z).astype(o_ref.dtype)


# --------------------------------------------------------------------------
# Tile / VMEM sizing
# --------------------------------------------------------------------------
def _round_up(x, m):
    return (x + m - 1) // m * m


def _vmem_limit_and_budget():
    # Per-TC VMEM: 128 MiB on v5e/v6e, 64 MiB on v7x.  Be conservative when we
    # cannot query it so the same tiling is safe on every generation.
    cap = 64 * 1024 * 1024
    try:
        cap = int(pltpu.get_tpu_info().vmem_capacity_bytes)
    except Exception:
        pass
    vmem_limit = min(cap * 3 // 4, 100 * 1024 * 1024)
    tile_budget = min(vmem_limit // 2, 28 * 1024 * 1024)   # double-buffered in+out
    return vmem_limit, tile_budget


def _pick_spatial_tile(hw, cin, cout, tile_budget_bytes, max_spatial_tile=None):
    hw128 = _round_up(hw, 128)
    # Target >= ~2 MiB of x per grid step to amortize the ~0.35 us step overhead.
    ts_target = _round_up(max(128, (2 << 20) // (cin * 4)), 128)
    # Hard cap: double-buffered input + output tiles must fit the VMEM budget.
    ts_cap = max(128, (tile_budget_bytes // (8 * (cin + cout))) // 128 * 128)
    ts = min(hw128, max(512, ts_target))
    ts = min(ts, ts_cap)
    if max_spatial_tile is not None:
        ts = min(ts, max(128, (max_spatial_tile // 128) * 128))
    return ts


# --------------------------------------------------------------------------
# Wrapper
# --------------------------------------------------------------------------
def vnet_out_single_block(x, conv_w, conv_b, bn_gamma, bn_beta, prelu_a,
                          *, eps=1e-5, max_spatial_tile=None):
    """x: (N, Cin, H, W) float32.  conv_w: (classes, Cin, 1, 1).  Returns NCHW."""
    N, Cin, H, W = x.shape
    classes = conv_w.shape[0]
    HW = H * W

    vmem_limit, tile_budget = _vmem_limit_and_budget()
    # When the conv shrinks channels, storing y is cheaper than re-reading x:
    # traffic/pixel  2*Cin + classes  ->  Cin + 3*classes  words.
    write_y = Cin > 2 * classes

    TS = _pick_spatial_tile(HW, Cin, classes, tile_budget, max_spatial_tile)
    HW_pad = _round_up(HW, TS)
    pad = HW_pad - HW
    n_s_tiles = HW_pad // TS
    # Extra 'parallel' spatial axis so both v7x TensorCores work when N is small.
    n_outer = 2 if (n_s_tiles >= 2 and n_s_tiles % 2 == 0) else 1
    n_inner = n_s_tiles // n_outer

    # NCHW viewed channel-major -- pure reshape; pad spatial axis to HW_pad.
    xr = x.reshape(N, Cin, HW).astype(jnp.float32)
    if pad:
        xr = jnp.pad(xr, ((0, 0), (0, 0), (0, pad)))
    w = conv_w.reshape(classes, Cin).astype(jnp.float32)
    b = conv_b.reshape(classes, 1).astype(jnp.float32)
    gamma = bn_gamma.reshape(classes, 1).astype(jnp.float32)
    beta = bn_beta.reshape(classes, 1).astype(jnp.float32)
    alpha = prelu_a.reshape(classes, 1).astype(jnp.float32)

    cp1 = pltpu.CompilerParams(
        dimension_semantics=("parallel", "parallel", "arbitrary"),
        vmem_limit_bytes=vmem_limit)
    cp2 = pltpu.CompilerParams(
        dimension_semantics=("parallel", "parallel"),
        vmem_limit_bytes=vmem_limit)

    # ---- pass 1: conv + partial batch statistics ---------------------------
    x_spec = pl.BlockSpec((1, Cin, TS), lambda n, so, si: (n, 0, so * n_inner + si))
    w_spec = pl.BlockSpec((classes, Cin), lambda n, so, si: (0, 0))
    vec_spec = pl.BlockSpec((classes, 1), lambda n, so, si: (0, 0))
    stat_spec = pl.BlockSpec((1, 1, classes, 1), lambda n, so, si: (n, so, 0, 0))
    stats_shape = jax.ShapeDtypeStruct((N, n_outer, classes, 1), jnp.float32)

    if write_y:
        y_spec = pl.BlockSpec((1, classes, TS),
                              lambda n, so, si: (n, 0, so * n_inner + si))
        y, psum, psq = pl.pallas_call(
            _conv_stats_write_kernel,
            out_shape=(jax.ShapeDtypeStruct((N, classes, HW_pad), jnp.float32),
                       stats_shape, stats_shape),
            grid_spec=pltpu.PrefetchScalarGridSpec(
                num_scalar_prefetch=0,
                grid=(N, n_outer, n_inner),
                in_specs=[x_spec, w_spec, vec_spec],
                out_specs=(y_spec, stat_spec, stat_spec)),
            compiler_params=cp1,
        )(xr, w, b)
    else:
        psum, psq = pl.pallas_call(
            _conv_stats_kernel,
            out_shape=(stats_shape, stats_shape),
            grid_spec=pltpu.PrefetchScalarGridSpec(
                num_scalar_prefetch=0,
                grid=(N, n_outer, n_inner),
                in_specs=[x_spec, w_spec, vec_spec],
                out_specs=(stat_spec, stat_spec)),
            compiler_params=cp1,
        )(xr, w, b)

    # ---- fold BatchNorm (training-mode batch stats) into a per-channel affine
    # Padded lanes contribute exactly y = b per channel; subtract analytically.
    count = float(N * HW)
    csum = jnp.sum(psum, axis=(0, 1))            # (classes, 1)
    csq = jnp.sum(psq, axis=(0, 1))              # (classes, 1)
    if pad:
        csum = csum - float(N * pad) * b
        csq = csq - float(N * pad) * (b * b)
    mean = csum / count
    # E[y^2]-E[y]^2 is cancellation-prone; clamp to keep rsqrt finite.
    var = jnp.maximum(csq / count - mean * mean, 0.0)   # biased batch variance
    scale = gamma * jax.lax.rsqrt(var + eps)     # (classes, 1)
    # TODO(synk): BatchNorm2d running_mean/running_var buffer updates (training
    # side effect) are not emitted; they do not affect the returned tensor.

    # ---- pass 2: normalize + PReLU, output written directly in NCHW --------
    out_spec = pl.BlockSpec((1, classes, TS), lambda n, s: (n, 0, s))
    cvec_spec = pl.BlockSpec((classes, 1), lambda n, s: (0, 0))

    if write_y:
        shift = beta - mean * scale
        out = pl.pallas_call(
            _bn_prelu_kernel,
            out_shape=jax.ShapeDtypeStruct((N, classes, HW_pad), jnp.float32),
            grid_spec=pltpu.PrefetchScalarGridSpec(
                num_scalar_prefetch=0,
                grid=(N, n_s_tiles),
                in_specs=[pl.BlockSpec((1, classes, TS), lambda n, s: (n, 0, s)),
                          cvec_spec, cvec_spec, cvec_spec],
                out_specs=out_spec),
            compiler_params=cp2,
        )(y, scale, shift, alpha)
    else:
        w_fold = w * scale                        # (classes, Cin)
        b_fold = (b - mean) * scale + beta        # (classes, 1)
        out = pl.pallas_call(
            _conv_bn_prelu_kernel,
            out_shape=jax.ShapeDtypeStruct((N, classes, HW_pad), jnp.float32),
            grid_spec=pltpu.PrefetchScalarGridSpec(
                num_scalar_prefetch=0,
                grid=(N, n_s_tiles),
                in_specs=[pl.BlockSpec((1, Cin, TS), lambda n, s: (n, 0, s)),
                          pl.BlockSpec((classes, Cin), lambda n, s: (0, 0)),
                          cvec_spec, cvec_spec],
                out_specs=out_spec),
            compiler_params=cp2,
        )(xr, w_fold, b_fold, alpha)

    if pad:
        out = out[:, :, :HW]
    return out.reshape(N, classes, H, W)


# --------------------------------------------------------------------------
# Pure-JAX reference (mirrors the PyTorch forward in training mode)
# --------------------------------------------------------------------------
def _reference(x, conv_w, conv_b, bn_gamma, bn_beta, prelu_a, eps=1e-5):
    N, Cin, H, W = x.shape
    classes = conv_w.shape[0]
    w2 = conv_w.reshape(classes, Cin)
    y = jnp.einsum("nchw,kc->nkhw", x, w2) + conv_b.reshape(1, classes, 1, 1)
    mean = jnp.mean(y, axis=(0, 2, 3), keepdims=True)
    var = jnp.mean((y - mean) ** 2, axis=(0, 2, 3), keepdims=True)  # biased
    yh = (y - mean) / jnp.sqrt(var + eps)
    z = yh * bn_gamma.reshape(1, classes, 1, 1) + bn_beta.reshape(1, classes, 1, 1)
    a = prelu_a.reshape(1, classes, 1, 1)
    return jnp.where(z > 0, z, a * z)


def _make_inputs(key, N, Cin, classes, H, W):
    k1, k2, k3 = jax.random.split(key, 3)
    x = jax.random.normal(k1, (N, Cin, H, W), dtype=jnp.float32)
    conv_w = 0.1 * jax.random.normal(k2, (classes, Cin, 1, 1), dtype=jnp.float32)
    conv_b = 0.1 * jax.random.normal(k3, (classes,), dtype=jnp.float32)
    bn_gamma = jnp.ones((classes,), dtype=jnp.float32)       # BatchNorm default init
    bn_beta = jnp.zeros((classes,), dtype=jnp.float32)
    prelu_a = jnp.full((classes,), 0.25, dtype=jnp.float32)  # PReLU default init
    return x, conv_w, conv_b, bn_gamma, bn_beta, prelu_a


if __name__ == "__main__":
    key = jax.random.PRNGKey(0)
    k_a, k_b, k_c = jax.random.split(key, 3)

    # 1) Main config (Cin <= 2*classes -> recompute-from-x path).
    args = _make_inputs(k_a, N=2, Cin=4, classes=4, H=16, W=16)
    out = jax.block_until_ready(vnet_out_single_block(*args))
    ref = _reference(*args)
    assert out.shape == (2, 4, 16, 16)
    assert jnp.allclose(out, ref, atol=1e-4, rtol=1e-4), "mismatch (recompute path)"

    # 2) classes << Cin -> write-y path; non-128-multiple HW -> padded lanes +
    #    analytic stats correction.
    args = _make_inputs(k_b, N=1, Cin=12, classes=2, H=16, W=18)
    out = jax.block_until_ready(vnet_out_single_block(*args))
    ref = _reference(*args)
    assert out.shape == (1, 2, 16, 18)
    assert jnp.allclose(out, ref, atol=1e-4, rtol=1e-4), "mismatch (write-y path)"

    # 3) Force a small tile -> multi-tile spatial grid + (parallel) outer split
    #    and cross-tile stats accumulation.
    args = _make_inputs(k_c, N=2, Cin=4, classes=4, H=16, W=16)
    out = jax.block_until_ready(vnet_out_single_block(*args, max_spatial_tile=128))
    ref = _reference(*args)
    assert jnp.allclose(out, ref, atol=1e-4, rtol=1e-4), "mismatch (tiled path)"

    print("KERNEL_OK")
</pallas_src>

<mosaic_0001>
module attributes {stable_mosaic.version = 11 : i64} {
  func.func @_conv_stats_kernel(%arg0: i32, %arg1: i32, %arg2: i32, %arg3: memref<1x4x256xf32, #tpu.memory_space<vmem>>, %arg4: memref<4x4xf32, #tpu.memory_space<vmem>>, %arg5: memref<4x1xf32, #tpu.memory_space<vmem>>, %arg6: memref<1x1x4x1xf32, #tpu.memory_space<vmem>>, %arg7: memref<1x1x4x1xf32, #tpu.memory_space<vmem>>) attributes {dimension_semantics = [#tpu.dimension_semantics<parallel>, #tpu.dimension_semantics<parallel>, #tpu.dimension_semantics<arbitrary>], iteration_bounds = array<i64: 2, 1, 1>, scalar_prefetch = 0 : i64, scratch_operands = 0 : i64, tpu.core_type = #tpu.core_type<tc>, window_params = [{transform_indices = @transform_0, window_bounds = array<i64: 1, 4, 256>}, {pipeline_mode = #tpu.pipeline_mode<synchronous>, transform_indices = @transform_1, window_bounds = array<i64: 4, 4>}, {pipeline_mode = #tpu.pipeline_mode<synchronous>, transform_indices = @transform_2, window_bounds = array<i64: 4, 1>}, {transform_indices = @transform_3, window_bounds = array<i64: 1, 1, 4, 1>}, {transform_indices = @transform_4, window_bounds = array<i64: 1, 1, 4, 1>}]} {
    %c0_i32 = arith.constant 0 : i32
    %0 = arith.cmpi eq, %arg2, %c0_i32 : i32
    %1 = arith.extui %0 : i1 to i32
    %c0_i32_0 = arith.constant 0 : i32
    %2 = arith.cmpi ne, %1, %c0_i32_0 : i32
    scf.if %2 {
      %cst_25 = arith.constant 0.000000e+00 : f32
      %27 = vector.broadcast %cst_25 : f32 to vector<1x1x4x1xf32>
      %c0_26 = arith.constant 0 : index
      %c0_27 = arith.constant 0 : index
      %c0_28 = arith.constant 0 : index
      %c0_29 = arith.constant 0 : index
      %28 = vector.load %arg6[%c0_26, %c0_27, %c0_28, %c0_29] : memref<1x1x4x1xf32, #tpu.memory_space<vmem>>, vector<1x1x4x1xf32>
      tpu.vector_store %arg6[%c0_26, %c0_27, %c0_28, %c0_29], %27 {strides = array<i32>} : memref<1x1x4x1xf32, #tpu.memory_space<vmem>>, vector<1x1x4x1xf32>,
      %cst_30 = arith.constant 0.000000e+00 : f32
      %29 = vector.broadcast %cst_30 : f32 to vector<1x1x4x1xf32>
      %c0_31 = arith.constant 0 : index
      %c0_32 = arith.constant 0 : index
      %c0_33 = arith.constant 0 : index
      %c0_34 = arith.constant 0 : index
      %30 = vector.load %arg7[%c0_31, %c0_32, %c0_33, %c0_34] : memref<1x1x4x1xf32, #tpu.memory_space<vmem>>, vector<1x1x4x1xf32>
      tpu.vector_store %arg7[%c0_31, %c0_32, %c0_33, %c0_34], %29 {strides = array<i32>} : memref<1x1x4x1xf32, #tpu.memory_space<vmem>>, vector<1x1x4x1xf32>,
    } else {
    }
    %c0 = arith.constant 0 : index
    %c0_1 = arith.constant 0 : index
    %3 = vector.load %arg4[%c0, %c0_1] : memref<4x4xf32, #tpu.memory_space<vmem>>, vector<4x4xf32>
    %c0_2 = arith.constant 0 : index
    %c0_3 = arith.constant 0 : index
    %c0_4 = arith.constant 0 : index
    %4 = vector.load %arg3[%c0_2, %c0_3, %c0_4] : memref<1x4x256xf32, #tpu.memory_space<vmem>>, vector<1x4x256xf32>
    %5 = vector.shape_cast %4 : vector<1x4x256xf32> to vector<4x256xf32>
    %cst = arith.constant dense<0.000000e+00> : vector<4x256xf32>
    %6 = tpu.matmul %3, %5, %cst {dimension_numbers = #tpu.dot_dimension_numbers<[1], [0], [0], [1], [0, 0, 1, 1], [], []>} : vector<4x4xf32>, vector<4x256xf32>, vector<4x256xf32> -> vector<4x256xf32>
    %c0_5 = arith.constant 0 : index
    %c0_6 = arith.constant 0 : index
    %7 = vector.load %arg5[%c0_5, %c0_6] : memref<4x1xf32, #tpu.memory_space<vmem>>, vector<4x1xf32>
    %8 = vector.broadcast %7 : vector<4x1xf32> to vector<4x256xf32>
    %9 = arith.addf %6, %8 : vector<4x256xf32>
    %c0_7 = arith.constant 0 : index
    %c0_8 = arith.constant 0 : index
    %c0_9 = arith.constant 0 : index
    %c0_10 = arith.constant 0 : index
    %10 = vector.load %arg6[%c0_7, %c0_8, %c0_9, %c0_10] : memref<1x1x4x1xf32, #tpu.memory_space<vmem>>, vector<1x1x4x1xf32>
    %11 = vector.shape_cast %10 : vector<1x1x4x1xf32> to vector<4x1xf32>
    %cst_11 = arith.constant dense<0.000000e+00> : vector<4xf32>
    %12 = vector.multi_reduction <add>, %9, %cst_11 [1] : vector<4x256xf32> to vector<4xf32>
    %13 = vector.shape_cast %12 : vector<4xf32> to vector<4x1xf32>
    %14 = arith.addf %11, %13 : vector<4x1xf32>
    %c0_12 = arith.constant 0 : index
    %c0_13 = arith.constant 0 : index
    %c0_14 = arith.constant 0 : index
    %c0_15 = arith.constant 0 : index
    %15 = vector.load %arg6[%c0_12, %c0_13, %c0_14, %c0_15] : memref<1x1x4x1xf32, #tpu.memory_space<vmem>>, vector<1x1x4x1xf32>
    %16 = vector.shape_cast %15 : vector<1x1x4x1xf32> to vector<4x1xf32>
    %17 = vector.shape_cast %14 : vector<4x1xf32> to vector<1x1x4x1xf32>
    tpu.vector_store %arg6[%c0_12, %c0_13, %c0_14, %c0_15], %17 {strides = array<i32>} : memref<1x1x4x1xf32, #tpu.memory_space<vmem>>, vector<1x1x4x1xf32>,
    %c0_16 = arith.constant 0 : index
    %c0_17 = arith.constant 0 : index
    %c0_18 = arith.constant 0 : index
    %c0_19 = arith.constant 0 : index
    %18 = vector.load %arg7[%c0_16, %c0_17, %c0_18, %c0_19] : memref<1x1x4x1xf32, #tpu.memory_space<vmem>>, vector<1x1x4x1xf32>
    %19 = vector.shape_cast %18 : vector<1x1x4x1xf32> to vector<4x1xf32>
    %20 = arith.mulf %9, %9 : vector<4x256xf32>
    %cst_20 = arith.constant dense<0.000000e+00> : vector<4xf32>
    %21 = vector.multi_reduction <add>, %20, %cst_20 [1] : vector<4x256xf32> to vector<4xf32>
    %22 = vector.shape_cast %21 : vector<4xf32> to vector<4x1xf32>
    %23 = arith.addf %19, %22 : vector<4x1xf32>
    %c0_21 = arith.constant 0 : index
    %c0_22 = arith.constant 0 : index
    %c0_23 = arith.constant 0 : index
    %c0_24 = arith.constant 0 : index
    %24 = vector.load %arg7[%c0_21, %c0_22, %c0_23, %c0_24] : memref<1x1x4x1xf32, #tpu.memory_space<vmem>>, vector<1x1x4x1xf32>
    %25 = vector.shape_cast %24 : vector<1x1x4x1xf32> to vector<4x1xf32>
    %26 = vector.shape_cast %23 : vector<4x1xf32> to vector<1x1x4x1xf32>
    tpu.vector_store %arg7[%c0_21, %c0_22, %c0_23, %c0_24], %26 {strides = array<i32>} : memref<1x1x4x1xf32, #tpu.memory_space<vmem>>, vector<1x1x4x1xf32>,
    return
  }
  func.func @transform_0(%arg0: i32, %arg1: i32, %arg2: i32) -> (i32, i32, i32) {
    %c1_i32 = arith.constant 1 : i32
    %0 = arith.muli %arg1, %c1_i32 : i32
    %1 = arith.addi %0, %arg2 : i32
    %c0_i32 = arith.constant 0 : i32
    %c0_i32_0 = arith.constant 0 : i32
    return %arg0, %c0_i32, %1 : i32, i32, i32
  }
  func.func @transform_1(%arg0: i32, %arg1: i32, %arg2: i32) -> (i32, i32) {
    %c0_i32 = arith.constant 0 : i32
    %c0_i32_0 = arith.constant 0 : i32
    %c0_i32_1 = arith.constant 0 : i32
    return %c0_i32, %c0_i32_0 : i32, i32
  }
  func.func @transform_2(%arg0: i32, %arg1: i32, %arg2: i32) -> (i32, i32) {
    %c0_i32 = arith.constant 0 : i32
    %c0_i32_0 = arith.constant 0 : i32
    %c0_i32_1 = arith.constant 0 : i32
    return %c0_i32, %c0_i32_0 : i32, i32
  }
  func.func @transform_3(%arg0: i32, %arg1: i32, %arg2: i32) -> (i32, i32, i32, i32) {
    %c0_i32 = arith.constant 0 : i32
    %c0_i32_0 = arith.constant 0 : i32
    %c0_i32_1 = arith.constant 0 : i32
    return %arg0, %arg1, %c0_i32, %c0_i32_0 : i32, i32, i32, i32
  }
  func.func @transform_4(%arg0: i32, %arg1: i32, %arg2: i32) -> (i32, i32, i32, i32) {
    %c0_i32 = arith.constant 0 : i32
    %c0_i32_0 = arith.constant 0 : i32
    %c0_i32_1 = arith.constant 0 : i32
    return %arg0, %arg1, %c0_i32, %c0_i32_0 : i32, i32, i32, i32
  }
}

</mosaic_0001>

<llo_original>
// kernel: tpu_custom_call.1
$region0: #{tpu_custom_call.1}
  #allocation0 [shape = 'u32[]', space=smem, size = 0x4, offset = 0x4, fixed_abs, tag = 'smem constant byte address 0x4 - core index']
  #allocation1 [shape = 'u32[144,128]{1,0:T(1,128)}', space=vmem, size = 0x12000, scoped, tag = 'internal scratch']
  %s0 = inlined_call_operand.hbm [shape: f32[2,4,256], index: 0, kind: input, shape index: {}]
  %s1 = inlined_call_operand.vmem [shape: f32[4,4], index: 1, kind: input, shape index: {}]
  %s2 = inlined_call_operand.vmem [shape: f32[4,1], index: 2, kind: input, shape index: {}]
  %s3 = inlined_call_operand.vmem [shape: f32[2,1,4,1], index: 3, kind: output, shape index: {0}]
  %s4 = inlined_call_operand.vmem [shape: f32[2,1,4,1], index: 4, kind: output, shape index: {1}]
  %5 = xla_tuple %s3, %s4
  %s6 = sld [smem:[#allocation0]]
  $region61: #{tpu_custom_call.1} parent=0
    _
  %s8 = ssub.s32 1, %s6
  %s9 = scalar_select 0, %s8, %s6
  $region1: #{tpu_custom_call.1} parent=0
    #allocation2 [shape = 'u8[8192]{0}', space=vmem, size = 0x2000, scoped, tag = 'input window, operand 0']
    #allocation3 [shape = 's32[2]{0}', space=sflag, size = 0x8, scoped, tag = 'scoped memory for tpu_custom_call.1']
    %10 = vsyncpa [#allocation3], 0
    %s11 = scalar_lea.sflag [#allocation3], 1
    %12 = vsyncpa %s11, 0
    loop: start=0, step=1, limit=4
    $region2: #{tpu_custom_call.1} parent=1 // loop_pre_header
      _
    $region3: #{tpu_custom_call.1} parent=1 // loop_header
      %s14 = sphi 0, %s18
      %p15 = scmp.ge.s32.totalorder %s14, 4
      %s21 = sphi 0, %s40
      %s22 = sphi 0, %s36
      %s23 = sphi 0, %s32
      %s24 = sphi 0, %s21
      %s25 = sphi 0, %s22
      %s26 = sphi 0, %s23
      %s27 = sphi 0, %s24
      %s28 = sphi 0, %s25
      %s29 = sphi 0, %s26
      %s47 = sphi 0, %s49
      %s50 = sphi 0, %s47
      %s51 = sphi 0, %s50
      %s67 = sphi 0, %s51
      %s71 = sphi 0, %s71
      %s73 = sphi 0, %s71
      %s74 = sphi 0, %s73
      %s88 = sphi 0, %s74
      %s92 = sphi 0, %s92
      %s94 = sphi 0, %s92
      %s95 = sphi 0, %s94
      %s109 = sphi 0, %s95
      %s117 = sphi 0, %s119
      %s120 = sphi 0, %s117
      %s121 = sphi 0, %s120
      %s137 = sphi 0, %s121
      %s145 = sphi 0, %s147
      %s148 = sphi 0, %s145
      %s149 = sphi 0, %s148
      %s165 = sphi 0, %s149
    $region4: #{tpu_custom_call.1} parent=1 // loop_header_branch
      %17 = sbr.rel (%p15) target = $region8
    $region5: #{tpu_custom_call.1} parent=1 // loop_body
      %s19 = ssub.s32 %s14, 1
      %s20 = ssub.s32 %s14, 2
      %s30 = sadd.s32 1, %s23
      %p31 = scmp.ge.s32.totalorder %s30, 1
      %s32 = scalar_select %p31, 0, %s30
      %s33 = sadd.s32 1, %s22
      %s34 = scalar_select %p31, %s33, %s22
      %p35 = scmp.ge.s32.totalorder %s34, 1
      %s36 = scalar_select %p35, 0, %s34
      %s37 = sadd.s32 1, %s21
      %s38 = scalar_select %p35, %s37, %s21
      %p39 = scmp.ge.s32.totalorder %s38, 2
      %s40 = scalar_select %p39, 0, %s38
      %s41 = sadd.s32 %s22, %s23
      %s42 = sadd.s32 %s36, %s32
      %s43 = ssub.s32 %s21, %s40
      %s44 = ssub.s32 %s41, %s42
      %s45 = sor.u32 %s43, %s44
      %p46 = scmp.eq.s32.totalorder %s45, 0
      %s48 = sadd.s32 %s47, 1
      %s49 = scalar_select %p46, %s47, %s48
      %p52 = pneg %p46
      %p53 = scmp.eq.s32.totalorder %s14, 1
      %p54 = por %p52, %p53
      %p55 = scmp.ne.s32.totalorder %s47, %s50
      %p56 = scmp.eq.s32.totalorder %s14, 0
      %p57 = por %p55, %p56
      %p58 = scmp.ne.s32.totalorder %s47, %s50
      %p59 = scmp.eq.s32.totalorder %s19, 1
      %p60 = por %p58, %p59
      %p61 = scmp.ne.s32.totalorder %s50, %s51
      %p62 = scmp.eq.s32.totalorder %s19, 0
      %p63 = por %p61, %p62
      %p64 = scmp.ne.s32.totalorder %s50, %s51
      %p65 = scmp.eq.s32.totalorder %s20, 1
      %p66 = por %p64, %p65
      %p68 = scmp.ne.s32.totalorder %s51, %s67
      %p69 = scmp.eq.s32.totalorder %s20, 0
      %p70 = por %p68, %p69
      %s72 = sadd.s32 %s71, 1
      %p75 = scmp.eq.s32.totalorder %s14, 1
      %p76 = scmp.ne.s32.totalorder %s71, %s73
      %p77 = scmp.eq.s32.totalorder %s14, 0
      %p78 = por %p76, %p77
      %p79 = scmp.ne.s32.totalorder %s71, %s73
      %p80 = scmp.eq.s32.totalorder %s19, 1
      %p81 = por %p79, %p80
      %p82 = scmp.ne.s32.totalorder %s73, %s74
      %p83 = scmp.eq.s32.totalorder %s19, 0
      %p84 = por %p82, %p83
      %p85 = scmp.ne.s32.totalorder %s73, %s74
      %p86 = scmp.eq.s32.totalorder %s20, 1
      %p87 = por %p85, %p86
      %p89 = scmp.ne.s32.totalorder %s74, %s88
      %p90 = scmp.eq.s32.totalorder %s20, 0
      %p91 = por %p89, %p90
      %s93 = sadd.s32 %s92, 1
      %p96 = scmp.eq.s32.totalorder %s14, 1
      %p97 = scmp.ne.s32.totalorder %s92, %s94
      %p98 = scmp.eq.s32.totalorder %s14, 0
      %p99 = por %p97, %p98
      %p100 = scmp.ne.s32.totalorder %s92, %s94
      %p101 = scmp.eq.s32.totalorder %s19, 1
      %p102 = por %p100, %p101
      %p103 = scmp.ne.s32.totalorder %s94, %s95
      %p104 = scmp.eq.s32.totalorder %s19, 0
      %p105 = por %p103, %p104
      %p106 = scmp.ne.s32.totalorder %s94, %s95
      %p107 = scmp.eq.s32.totalorder %s20, 1
      %p108 = por %p106, %p107
      %p110 = scmp.ne.s32.totalorder %s95, %s109
      %p111 = scmp.eq.s32.totalorder %s20, 0
      %p112 = por %p110, %p111
      %s113 = ssub.s32 %s21, %s40
      %s114 = ssub.s32 %s22, %s36
      %s115 = sor.u32 %s113, %s114
      %p116 = scmp.eq.s32.totalorder %s115, 0
      %s118 = sadd.s32 %s117, 1
      %s119 = scalar_select %p116, %s117, %s118
      %p122 = pneg %p116
      %p123 = scmp.eq.s32.totalorder %s14, 1
      %p124 = por %p122, %p123
      %p125 = scmp.ne.s32.totalorder %s117, %s120
      %p126 = scmp.eq.s32.totalorder %s14, 0
      %p127 = por %p125, %p126
      %p128 = scmp.ne.s32.totalorder %s117, %s120
      %p129 = scmp.eq.s32.totalorder %s19, 1
      %p130 = por %p128, %p129
      %p131 = scmp.ne.s32.totalorder %s120, %s121
      %p132 = scmp.eq.s32.totalorder %s19, 0
      %p133 = por %p131, %p132
      %p134 = scmp.ne.s32.totalorder %s120, %s121
      %p135 = scmp.eq.s32.totalorder %s20, 1
      %p136 = por %p134, %p135
      %p138 = scmp.ne.s32.totalorder %s121, %s137
      %p139 = scmp.eq.s32.totalorder %s20, 0
      %p140 = por %p138, %p139
      %s141 = ssub.s32 %s21, %s40
      %s142 = ssub.s32 %s22, %s36
      %s143 = sor.u32 %s141, %s142
      %p144 = scmp.eq.s32.totalorder %s143, 0
      %s146 = sadd.s32 %s145, 1
      %s147 = scalar_select %p144, %s145, %s146
      %p150 = pneg %p144
      %p151 = scmp.eq.s32.totalorder %s14, 1
      %p152 = por %p150, %p151
      %p153 = scmp.ne.s32.totalorder %s145, %s148
      %p154 = scmp.eq.s32.totalorder %s14, 0
      %p155 = por %p153, %p154
      %p156 = scmp.ne.s32.totalorder %s145, %s148
      %p157 = scmp.eq.s32.totalorder %s19, 1
      %p158 = por %p156, %p157
      %p159 = scmp.ne.s32.totalorder %s148, %s149
      %p160 = scmp.eq.s32.totalorder %s19, 0
      %p161 = por %p159, %p160
      %p162 = scmp.ne.s32.totalorder %s148, %s149
      %p163 = scmp.eq.s32.totalorder %s20, 1
      %p164 = por %p162, %p163
      %p166 = scmp.ne.s32.totalorder %s149, %s165
      %p167 = scmp.eq.s32.totalorder %s20, 0
      %p168 = por %p166, %p167
      %p169 = scmp.le.s32.totalorder 1, %s14
      %p170 = scmp.lt.s32.totalorder %s14, 3
      %p171 = pnand %p169, %p170
      %p172 = pneg %p171
      // Predicated region
      $region9: #{tpu_custom_call.1} parent=5 // pred_check
        _
      $region10: #{tpu_custom_call.1} parent=5 // pred_check_branch
        %174 = sbr.rel (%p171) target = $region12
      $region11: #{tpu_custom_call.1} parent=5 // pred_region
        %s175 = ssub.s32 %s14, 1
        // Predicated region
        $region13: #{tpu_custom_call.1} parent=11 // pred_check
          %p176 = pneg %p84
        $region14: #{tpu_custom_call.1} parent=11 // pred_check_branch
          %178 = sbr.rel (%p176) target = $region16
        $region15: #{tpu_custom_call.1} parent=11 // pred_region
          _
        $region16: #{tpu_custom_call.1} parent=11 // pred_fallthru
          _
        // Predicated region
        $region17: #{tpu_custom_call.1} parent=11 // pred_check
          %p179 = pneg %p105
        $region18: #{tpu_custom_call.1} parent=11 // pred_check_branch
          %181 = sbr.rel (%p179) target = $region20
        $region19: #{tpu_custom_call.1} parent=11 // pred_region
          _
        $region20: #{tpu_custom_call.1} parent=11 // pred_fallthru
          _
      $region12: #{tpu_custom_call.1} parent=5 // pred_fallthru
        _
      %p182 = scmp.lt.s32.totalorder %s14, 2
      // Predicated region
      $region21: #{tpu_custom_call.1} parent=5 // pred_check
        %p183 = pneg %p182
      $region22: #{tpu_custom_call.1} parent=5 // pred_check_branch
        %185 = sbr.rel (%p183) target = $region24
      $region23: #{tpu_custom_call.1} parent=5 // pred_region
        // Predicated region
        $region25: #{tpu_custom_call.1} parent=23 // pred_check
          %p186 = pneg %p57
        $region26: #{tpu_custom_call.1} parent=23 // pred_check_branch
          %188 = sbr.rel (%p186) target = $region28
        $region27: #{tpu_custom_call.1} parent=23 // pred_region
          %s189 = sand.u32 %s47, 1
          %s190 = scalar_lea.sflag [#allocation3], %s189
          %s191 = sand.u32 %s47, 1
          %s192 = smul.addr %s191, 8
          %s193 = scalar_lea.vmem [#allocation2], %s192
          %s194 = sadd.s32 %s22, %s23
          %s195 = smul.u32 2, %s194
          %s197 = ssub.s32 128, 128
          %198 = vsyncadd %s190, %s197
          %s199 = smul.addr %s21, 2
          %s200 = sadd.s32 %s195, %s199
          %s201 = smul.addr %s200, 64
          %s202 = scalar_lea.hbm %s0, %s201
          %s204 = sshll.u32 %s193, 4
          %s205 = int_to_ptr.vmem [resolvable:$true] %s204
          %207 = dma.hbm_to_vmem [thread:$0]  %s202, 128, %s205, %s190
        $region28: #{tpu_custom_call.1} parent=23 // pred_fallthru
          _
      $region24: #{tpu_custom_call.1} parent=5 // pred_fallthru
        _
      %p208 = scmp.le.s32.totalorder 1, %s14
      %p209 = scmp.lt.s32.totalorder %s14, 3
      %p210 = pnand %p208, %p209
      %p211 = pneg %p210
      // Predicated region
      $region29: #{tpu_custom_call.1} parent=5 // pred_check
        _
      $region30: #{tpu_custom_call.1} parent=5 // pred_check_branch
        %213 = sbr.rel (%p210) target = $region32
      $region31: #{tpu_custom_call.1} parent=5 // pred_region
        %s214 = ssub.s32 %s14, 1
        %s215 = sand.u32 %s50, 1
        %s216 = scalar_lea.sflag [#allocation3], %s215
        %s217 = sand.u32 %s50, 1
        %s218 = smul.addr %s217, 8
        %s219 = scalar_lea.vmem [#allocation2], %s218
        // Predicated region
        $region33: #{tpu_custom_call.1} parent=31 // pred_check
          %p220 = pneg %p63
        $region34: #{tpu_custom_call.1} parent=31 // pred_check_branch
          %222 = sbr.rel (%p220) target = $region36
        $region35: #{tpu_custom_call.1} parent=31 // pred_region
          %223 = dma.done %s216, 128
        $region36: #{tpu_custom_call.1} parent=31 // pred_fallthru
          _
        %s224 = sand.u32 %s50, 1
        %s225 = scalar_lea.sflag [#allocation3], %s224
        %s226 = sand.u32 %s50, 1
        %s227 = smul.addr %s226, 8
        %s228 = scalar_lea.vmem [#allocation2], %s227
        %p229 = pneg %p63
        %p230 = pneg %p60
        %p231 = pneg %p84
        %p232 = pneg %p81
        %p233 = pneg %p105
        %p234 = pneg %p102
        %p235 = pneg %p133
        %p236 = pneg %p130
        %p237 = scmp.lt.s32.totalorder %s24, 1
        %s238 = scalar_select %p237, %s24, 1
        %p239 = scmp.lt.s32.totalorder %s25, 0
        %s240 = scalar_select %p239, %s25, 0
        %s241 = sadd.s32 %s240, %s238
        %s242 = smul.addr %s241, 4
        %s243 = scalar_lea.vmem %s3, %s242
        %p244 = pneg %p161
        %p245 = pneg %p158
        %p246 = scmp.lt.s32.totalorder %s24, 1
        %s247 = scalar_select %p246, %s24, 1
        %p248 = scmp.lt.s32.totalorder %s25, 0
        %s249 = scalar_select %p248, %s25, 0
        %s250 = sadd.s32 %s249, %s247
        %s251 = smul.addr %s250, 4
        %s252 = scalar_lea.vmem %s4, %s251
        %s253 = sadd.s32 %s25, %s26
        %s254 = smul.u32 2, %s253
        %p255 = scmp.lt.s32.totalorder %s24, 1
        %s256 = scalar_select %p255, %s24, 1
        %p257 = scmp.lt.s32.totalorder %s25, 0
        %s258 = scalar_select %p257, %s25, 0
        %s259 = sadd.s32 %s258, %s256
        %s260 = smul.addr %s259, 4
        %s261 = scalar_lea.vmem %s3, %s260
        %p262 = scmp.lt.s32.totalorder %s24, 1
        %s263 = scalar_select %p262, %s24, 1
        %p264 = scmp.lt.s32.totalorder %s25, 0
        %s265 = scalar_select %p264, %s25, 0
        %s266 = sadd.s32 %s265, %s263
        %s267 = smul.addr %s266, 4
        %s268 = scalar_lea.vmem %s4, %s267
        %p269 = scmp.eq.s32.totalorder %s26, 0
        // Predicated region
        $region37: #{tpu_custom_call.1} parent=31 // pred_check
          %p270 = pneg %p269
        $region38: #{tpu_custom_call.1} parent=31 // pred_check_branch
          %272 = sbr.rel (%p270) target = $region40
        $region39: #{tpu_custom_call.1} parent=31 // pred_region
          %vm273 = vcmask 3072
          %274 = vst.msk [vmem:[%s261] sm:$0xf] %vm273, 0.0
          %275 = vst.msk [vmem:[%s268] sm:$0xf] %vm273, 0.0
        $region40: #{tpu_custom_call.1} parent=31 // pred_fallthru
          _
        %v276 = vld [vmem:[%s1] sm:$0xf]
        %v277 = vld [vmem:[%s219] sm:$0xff]
        %v278 = vld [vmem:[%s2] sm:$0xf]
        %280 = vset.pattern.permute.xlu0 0
        %281 = vperm.xlu0 %280, %v278
        %v282 = vpop.permute.xlu0 %281
        %v285 = vcombine.high %v277, %v277
        %vm286 = vcmask 31744
        %v288 = vsel %vm286, %v276, 0
        %vm290 = vcmask 1043456
        %v291 = vsel %vm290, %v277, 0
        %v293 = vsel %vm290, %v285, 0
        %295 = vmatprep.subr.mxu0 %v293
        %296 = vmatpush1.msra.mxu0 %v291
        %297 = vmatprep.subr.mxu0 0.0
        %298 = vmatpush1.msra.mxu0 0.0
        %299 = vmatprep.subr.mxu0 0.0
        %300 = vmatpush1.msra.mxu0 0.0
        %301 = vmatprep.subr.mxu0 0.0
        %302 = vmatpush1.msra.mxu0 0.0
        %303 = vmatprep.subr.mxu0 0.0
        %304 = vmatpush1.msra.mxu0 0.0
        %305 = vmatprep.subr.mxu0 0.0
        %306 = vmatpush1.msra.mxu0 0.0
        %307 = vmatprep.subr.mxu0 0.0
        %308 = vmatpush1.msra.mxu0 0.0
        %309 = vmatprep.subr.mxu0 0.0
        %310 = vmatpush1.msra.mxu0 0.0
        %311 = vmatprep.subr.mxu0 0.0
        %312 = vmatpush1.msra.mxu0 0.0
        %313 = vmatprep.subr.mxu0 0.0
        %314 = vmatpush1.msra.mxu0 0.0
        %315 = vmatprep.subr.mxu0 0.0
        %316 = vmatpush1.msra.mxu0 0.0
        %317 = vmatprep.subr.mxu0 0.0
        %318 = vmatpush1.msra.mxu0 0.0
        %319 = vmatprep.subr.mxu0 0.0
        %320 = vmatpush1.msra.mxu0 0.0
        %321 = vmatprep.subr.mxu0 0.0
        %322 = vmatpush1.msra.mxu0 0.0
        %323 = vmatprep.subr.mxu0 0.0
        %324 = vmatpush1.msra.mxu0 0.0
        %325 = vmatprep.subr.mxu0 0.0
        %326 = vmatpush1.msra.mxu0 0.0
        %327 = vmatprep.subr.mxu0 0.0
        %328 = vmatpush1.msra.mxu0 0.0
        %329 = vmatprep.subr.mxu0 0.0
        %330 = vmatpush1.msra.mxu0 0.0
        %331 = vmatprep.subr.mxu0 0.0
        %332 = vmatpush1.msra.mxu0 0.0
        %333 = vmatprep.subr.mxu0 0.0
        %334 = vmatpush1.msra.mxu0 0.0
        %335 = vmatprep.subr.mxu0 0.0
        %336 = vmatpush1.msra.mxu0 0.0
        %337 = vmatprep.subr.mxu0 0.0
        %338 = vmatpush1.msra.mxu0 0.0
        %339 = vmatprep.subr.mxu0 0.0
        %340 = vmatpush1.msra.mxu0 0.0
        %341 = vmatprep.subr.mxu0 0.0
        %342 = vmatpush1.msra.mxu0 0.0
        %343 = vmatprep.subr.mxu0 0.0
        %344 = vmatpush1.msra.mxu0 0.0
        %345 = vmatprep.subr.mxu0 0.0
        %346 = vmatpush1.msra.mxu0 0.0
        %347 = vmatprep.subr.mxu0 0.0
        %348 = vmatpush1.msra.mxu0 0.0
        %349 = vmatprep.subr.mxu0 0.0
        %350 = vmatpush1.msra.mxu0 0.0
        %351 = vmatprep.subr.mxu0 0.0
        %352 = vmatpush1.msra.mxu0 0.0
        %353 = vmatprep.subr.mxu0 0.0
        %354 = vmatpush1.msra.mxu0 0.0
        %355 = vmatprep.subr.mxu0 0.0
        %356 = vmatpush1.msra.mxu0 0.0
        %357 = vmatprep.subr.mxu0 0.0
        %358 = vmatpush1.msra.mxu0 0.0
        %359 = vmatprep.mubr.f32.mxu0 0.0
        %360 = vmatmul.mubr.f32.gmra.mrb[0].mxu0 %v288
        %v361 = vpop.f32.mrb[0].mxu0
        %v362 = vadd.f32 %v282, %v361
        %v363 = vpop.f32.mrb[0].mxu0
        %v364 = vadd.f32 %v282, %v363
        %365 = vdwg.mxu0
        %v366 = vld [vmem:[%s261] sm:$0xf]
        %v367 = vsel %vm290, %v362, 0.0
        %v368 = vsel %vm290, %v364, 0.0
        %v369 = vadd.f32 %v367, %v368
        %370 = vadd.xlane.f32.xlu0 %v369
        %v371 = vpop.xlane.xlu0 %370
        %v372 = vadd.f32 %v366, %v371
        %vm373 = vcmask 3072
        %374 = vst.msk [vmem:[%s261] sm:$0xf] %vm373, %v372
        %v375 = vld [vmem:[%s268] sm:$0xf]
        %v376 = vmul.f32 %v362, %v362
        %v377 = vmul.f32 %v364, %v364
        %v378 = vsel %vm290, %v376, 0.0
        %v379 = vsel %vm290, %v377, 0.0
        %v380 = vadd.f32 %v378, %v379
        %381 = vadd.xlane.f32.xlu0 %v380
        %v382 = vpop.xlane.xlu0 %381
        %v383 = vadd.f32 %v375, %v382
        %384 = vst.msk [vmem:[%s268] sm:$0xf] %vm373, %v383
        %p385 = scmp.lt.s32.totalorder %s24, 1
        %s386 = scalar_select %p385, %s24, 1
        %p387 = scmp.lt.s32.totalorder %s25, 0
        %s388 = scalar_select %p387, %s25, 0
        %s389 = sadd.s32 %s388, %s386
        %s390 = smul.addr %s389, 4
        %s391 = scalar_lea.vmem %s3, %s390
        %p392 = scmp.lt.s32.totalorder %s24, 1
        %s393 = scalar_select %p392, %s24, 1
        %p394 = scmp.lt.s32.totalorder %s25, 0
        %s395 = scalar_select %p394, %s25, 0
        %s396 = sadd.s32 %s395, %s393
        %s397 = smul.addr %s396, 4
        %s398 = scalar_lea.vmem %s4, %s397
        // Predicated region
        $region41: #{tpu_custom_call.1} parent=31 // pred_check
          %p399 = pneg %p130
        $region42: #{tpu_custom_call.1} parent=31 // pred_check_branch
          %401 = sbr.rel (%p399) target = $region44
        $region43: #{tpu_custom_call.1} parent=31 // pred_region
          _
        $region44: #{tpu_custom_call.1} parent=31 // pred_fallthru
          _
        // Predicated region
        $region45: #{tpu_custom_call.1} parent=31 // pred_check
          %p402 = pneg %p158
        $region46: #{tpu_custom_call.1} parent=31 // pred_check_branch
          %404 = sbr.rel (%p402) target = $region48
        $region47: #{tpu_custom_call.1} parent=31 // pred_region
          _
        $region48: #{tpu_custom_call.1} parent=31 // pred_fallthru
          _
      $region32: #{tpu_custom_call.1} parent=5 // pred_fallthru
        _
      %p405 = scmp.le.s32.totalorder 2, %s14
      // Predicated region
      $region49: #{tpu_custom_call.1} parent=5 // pred_check
        %p406 = pneg %p405
      $region50: #{tpu_custom_call.1} parent=5 // pred_check_branch
        %408 = sbr.rel (%p406) target = $region52
      $region51: #{tpu_custom_call.1} parent=5 // pred_region
        %s409 = ssub.s32 %s14, 2
        // Predicated region
        $region53: #{tpu_custom_call.1} parent=51 // pred_check
          %p410 = pneg %p136
        $region54: #{tpu_custom_call.1} parent=51 // pred_check_branch
          %412 = sbr.rel (%p410) target = $region56
        $region55: #{tpu_custom_call.1} parent=51 // pred_region
          %p413 = scmp.lt.s32.totalorder %s27, 1
          %s414 = scalar_select %p413, %s27, 1
          %p415 = scmp.lt.s32.totalorder %s28, 0
          %s416 = scalar_select %p415, %s28, 0
          %s417 = sadd.s32 %s416, %s414
          %s418 = smul.addr %s417, 4
          %s419 = scalar_lea.vmem %s3, %s418
        $region56: #{tpu_custom_call.1} parent=51 // pred_fallthru
          _
        // Predicated region
        $region57: #{tpu_custom_call.1} parent=51 // pred_check
          %p420 = pneg %p164
        $region58: #{tpu_custom_call.1} parent=51 // pred_check_branch
          %422 = sbr.rel (%p420) target = $region60
        $region59: #{tpu_custom_call.1} parent=51 // pred_region
          %p423 = scmp.lt.s32.totalorder %s27, 1
          %s424 = scalar_select %p423, %s27, 1
          %p425 = scmp.lt.s32.totalorder %s28, 0
          %s426 = scalar_select %p425, %s28, 0
          %s427 = sadd.s32 %s426, %s424
          %s428 = smul.addr %s427, 4
          %s429 = scalar_lea.vmem %s4, %s428
        $region60: #{tpu_custom_call.1} parent=51 // pred_fallthru
          _
      $region52: #{tpu_custom_call.1} parent=5 // pred_fallthru
        _
    $region6: #{tpu_custom_call.1} parent=1 // loop_footer
      %s18 = sadd.s32 1, %s14
    $region7: #{tpu_custom_call.1} parent=1 // loop_footer_branch
      %13 = sbr.rel target = $region3
    $region8: #{tpu_custom_call.1} parent=1 // loop_exit
      _
    %430 = vsyncpa [#allocation3], 1
    %s431 = scalar_lea.sflag [#allocation3], 1
    %432 = vsyncpa %s431, 1

</llo_original>
